<compile_context>
chip_gen: v7x
topology: tpu7x:2x2x1
jax: 0.10.0
libtpu: 0.0.40
codegen_flags: <defaults>
</compile_context>

<pallas_src>
import jax
import jax.numpy as jnp
from jax.experimental import pallas as pl
from jax.experimental.pallas import tpu as pltpu


def _invis_mask_wrapper_kernel(x_ref, ab_ref, out_ref):
    # Streaming elementwise map: out = x * a + b
    #   ab_ref[0] = a = m*exp(s) + (1-m)   (1 row, lane-dense D)
    #   ab_ref[1] = b = t*m
    x = x_ref[...].astype(jnp.float32)
    a = ab_ref[0, :]
    b = ab_ref[1, :]
    out_ref[...] = (x * a + b).astype(out_ref.dtype)


def _pick_batch_tile(B):
    """Rows per grid step.

    B < 16          -> single full block (tiny payload).
    B >= 16         -> at least 2 tiles (megacore sharding on v7x), 8-row
                       aligned for the (8,128) constraint, capped at 1024 rows
                       (4 MiB/block at D=1024 f32; double-buffered x+out =
                       16 MiB, fine for v6e/v7x scoped VMEM).
    """
    if B < 16:
        return B
    return min(1024, 8 * pl.cdiv(B, 16))


def make_invisibility_mask_wrapper_forward(mask, log_scale, shift):
    """Build a forward() closure with all mask/net_ constants pre-folded.

    mask: (C,H,W) binary {0,1}; log_scale/shift: (C,) per-channel affine params.
    """
    C, H, W = mask.shape
    D = C * H * W

    m = mask.astype(jnp.float32)                                            # (C,H,W)
    s = jnp.broadcast_to(log_scale.astype(jnp.float32)[:, None, None], (C, H, W))
    t = jnp.broadcast_to(shift.astype(jnp.float32)[:, None, None], (C, H, W))

    # Pre-folded constants (computed once, cached in the closure).
    a_flat = (m * jnp.exp(s) + (1.0 - m)).reshape(D)                        # (D,)
    b_flat = (t * m).reshape(D)                                             # (D,)
    ab = jnp.stack([a_flat, b_flat], axis=0)                                # (2, D)
    logj_const = jnp.sum(s * m)                                             # scalar

    _TINY_BYTES = 256 * 1024  # below this, an XLA fusion beats a pallas_call launch

    def forward(x, log0, *, use_pallas=None):
        B = x.shape[0]
        assert x.shape[1:] == (C, H, W)
        x_flat = x.reshape(B, D)  # caller's dtype; no extra HBM pass

        if use_pallas is None:
            use_pallas = (B * D * x.dtype.itemsize) >= _TINY_BYTES

        if use_pallas:
            TB = _pick_batch_tile(B)
            grid = (pl.cdiv(B, TB),)
            cp = dict(dimension_semantics=("parallel",))
            if TB > 512:
                # v5e default scoped VMEM is 16 MiB; 4 x 4 MiB buffers need more.
                cp["vmem_limit_bytes"] = 32 << 20
            out_flat = pl.pallas_call(
                _invis_mask_wrapper_kernel,
                out_shape=jax.ShapeDtypeStruct((B, D), x.dtype),
                grid=grid,
                in_specs=[
                    pl.BlockSpec((TB, D), lambda i: (i, 0)),   # x tile
                    pl.BlockSpec((2, D), lambda i: (0, 0)),    # packed (a; b) constant
                ],
                out_specs=pl.BlockSpec((TB, D), lambda i: (i, 0)),
                compiler_params=pltpu.CompilerParams(**cp),
            )(x_flat, ab)
        else:
            # Tiny-tensor path: let XLA fuse it with surrounding ops.
            out_flat = (x_flat.astype(jnp.float32) * a_flat + b_flat).astype(x.dtype)

        logj = log0.astype(jnp.float32) + logj_const
        return out_flat.reshape(B, C, H, W), logj

    return forward


def _reference_forward(x, mask, log_scale, shift, log0):
    """Pure-JAX reference mirroring the PyTorch module semantics."""
    m = mask.astype(jnp.float32)[None]                 # (1,C,H,W)
    s = jnp.broadcast_to(log_scale[None, :, None, None], x.shape)
    t = jnp.broadcast_to(shift[None, :, None, None], x.shape)
    x_v = x * m
    x_inv = x * (1.0 - m)
    y = x_v * jnp.exp(s) + t                           # net_.forward
    y = y * m                                          # purify(channel=0)
    logj_density = s * m                               # purify(channel=0)
    logj = jnp.sum(logj_density, axis=(1, 2, 3))       # sum_density
    return y + x_inv, log0 + logj                      # mask.cat, log0 + logJ


if __name__ == "__main__":
    B, C, H, W = 2, 4, 16, 16
    key = jax.random.PRNGKey(0)
    x = jax.random.normal(key, (B, C, H, W), dtype=jnp.float32)

    # Deterministic per-channel parameters of the inner affine net_.
    log_scale = 0.1 * jnp.arange(C, dtype=jnp.float32) - 0.15
    shift = 0.05 * (jnp.arange(C, dtype=jnp.float32) + 1.0)

    # Checkerboard (even/odd) spatial mask, shared across channels.
    hh, ww = jnp.meshgrid(jnp.arange(H), jnp.arange(W), indexing="ij")
    mask2d = ((hh + ww) % 2 == 0).astype(jnp.float32)            # (H, W)
    mask = jnp.broadcast_to(mask2d[None], (C, H, W))             # (C, H, W)

    log0 = jnp.zeros((B,), dtype=jnp.float32)

    # Reference.
    ref_out, ref_logj = _reference_forward(x, mask, log_scale, shift, log0)

    # Kernel (constants folded once by the factory; force the Pallas path so
    # the kernel itself is exercised even at this tiny demo size).
    forward = make_invisibility_mask_wrapper_forward(mask, log_scale, shift)
    out, logj = forward(x, log0, use_pallas=True)
    out = jax.block_until_ready(out)
    logj = jax.block_until_ready(logj)

    assert out.shape == (B, C, H, W) and logj.shape == (B,)
    assert jnp.allclose(out, ref_out, atol=1e-5, rtol=1e-5)
    assert jnp.allclose(logj, ref_logj, atol=1e-4, rtol=1e-5)

    print("KERNEL_OK")
</pallas_src>

<mosaic_0001>
module attributes {stable_mosaic.version = 11 : i64} {
  func.func @_invis_mask_wrapper_kernel(%arg0: i32, %arg1: memref<2x1024xf32, #tpu.memory_space<vmem>>, %arg2: memref<2x1024xf32, #tpu.memory_space<vmem>>, %arg3: memref<2x1024xf32, #tpu.memory_space<vmem>>) attributes {dimension_semantics = [#tpu.dimension_semantics<parallel>], iteration_bounds = array<i64: 1>, scalar_prefetch = 0 : i64, scratch_operands = 0 : i64, tpu.core_type = #tpu.core_type<tc>, window_params = [{transform_indices = @transform_0, window_bounds = array<i64: 2, 1024>}, {pipeline_mode = #tpu.pipeline_mode<synchronous>, transform_indices = @transform_1, window_bounds = array<i64: 2, 1024>}, {transform_indices = @transform_2, window_bounds = array<i64: 2, 1024>}]} {
    %c0 = arith.constant 0 : index
    %c0_0 = arith.constant 0 : index
    %0 = vector.load %arg1[%c0, %c0_0] : memref<2x1024xf32, #tpu.memory_space<vmem>>, vector<2x1024xf32>
    %c0_1 = arith.constant 0 : index
    %c0_2 = arith.constant 0 : index
    %1 = vector.load %arg2[%c0_1, %c0_2] : memref<2x1024xf32, #tpu.memory_space<vmem>>, vector<1x1024xf32>
    %2 = vector.shape_cast %1 : vector<1x1024xf32> to vector<1024xf32>
    %c1 = arith.constant 1 : index
    %c0_3 = arith.constant 0 : index
    %3 = vector.load %arg2[%c1, %c0_3] : memref<2x1024xf32, #tpu.memory_space<vmem>>, vector<1x1024xf32>
    %4 = vector.shape_cast %3 : vector<1x1024xf32> to vector<1024xf32>
    %5 = vector.shape_cast %2 : vector<1024xf32> to vector<1x1024xf32>
    %6 = vector.broadcast %5 : vector<1x1024xf32> to vector<2x1024xf32>
    %7 = arith.mulf %0, %6 : vector<2x1024xf32>
    %8 = vector.shape_cast %4 : vector<1024xf32> to vector<1x1024xf32>
    %9 = vector.broadcast %8 : vector<1x1024xf32> to vector<2x1024xf32>
    %10 = arith.addf %7, %9 : vector<2x1024xf32>
    %c0_4 = arith.constant 0 : index
    %c0_5 = arith.constant 0 : index
    %11 = vector.load %arg3[%c0_4, %c0_5] : memref<2x1024xf32, #tpu.memory_space<vmem>>, vector<2x1024xf32>
    tpu.vector_store %arg3[%c0_4, %c0_5], %10 {strides = array<i32>} : memref<2x1024xf32, #tpu.memory_space<vmem>>, vector<2x1024xf32>,
    return
  }
  func.func @transform_0(%arg0: i32) -> (i32, i32) {
    %c0_i32 = arith.constant 0 : i32
    %c0_i32_0 = arith.constant 0 : i32
    return %arg0, %c0_i32 : i32, i32
  }
  func.func @transform_1(%arg0: i32) -> (i32, i32) {
    %c0_i32 = arith.constant 0 : i32
    %c0_i32_0 = arith.constant 0 : i32
    %c0_i32_1 = arith.constant 0 : i32
    return %c0_i32, %c0_i32_0 : i32, i32
  }
  func.func @transform_2(%arg0: i32) -> (i32, i32) {
    %c0_i32 = arith.constant 0 : i32
    %c0_i32_0 = arith.constant 0 : i32
    return %arg0, %c0_i32 : i32, i32
  }
}

</mosaic_0001>

<llo_original>
// kernel: tpu_custom_call.1
$region0: #{tpu_custom_call.1}
  #allocation0 [shape = 'u32[]', space=smem, size = 0x4, offset = 0x4, fixed_abs, tag = 'smem constant byte address 0x4 - core index']
  #allocation1 [shape = 'u32[144,128]{1,0:T(1,128)}', space=vmem, size = 0x12000, scoped, tag = 'internal scratch']
  %s0 = inlined_call_operand.hbm [shape: f32[2,1024], index: 0, kind: input, shape index: {}]
  %s1 = inlined_call_operand.hbm [shape: f32[2,1024], index: 1, kind: input, shape index: {}]
  %s2 = inlined_call_operand.hbm [shape: f32[2,1024], index: 2, kind: output, shape index: {}]
  %s3 = sld [smem:[#allocation0]]
  $region26: #{tpu_custom_call.1} parent=0
    _
  %s5 = ssub.s32 1, %s3
  %s6 = scalar_select 0, %s5, %s3
  $region1: #{tpu_custom_call.1} parent=0
    #allocation2 [shape = 'u8[8192]{0}', space=vmem, size = 0x2000, scoped, tag = 'input window, operand 0, single buffered']
    #allocation3 [shape = 's32[1]{0}', space=sflag, size = 0x4, scoped, tag = 'scoped memory for tpu_custom_call.1']
    #allocation4 [shape = 's32[1]{0}', space=sflag, size = 0x4, scoped, tag = 'scoped memory for tpu_custom_call.1']
    #allocation5 [shape = 'u8[8192]{0}', space=vmem, size = 0x2000, scoped, tag = 'input window, operand 1, single buffered']
    #allocation6 [shape = 's32[1]{0}', space=sflag, size = 0x4, scoped, tag = 'scoped memory for tpu_custom_call.1']
    #allocation7 [shape = 'u8[8192]{0}', space=vmem, size = 0x2000, scoped, tag = 'output window, operand 0, single buffered']
    %7 = vsyncpa [#allocation3], 0
    %8 = vsyncpa [#allocation6], 0
    %9 = vsyncpa [#allocation4], 0
    // Predicated region
    $region2: #{tpu_custom_call.1} parent=1 // pred_check
      _
    $region3: #{tpu_custom_call.1} parent=1 // pred_check_branch
      %11 = sbr.rel (0) target = $region5
    $region4: #{tpu_custom_call.1} parent=1 // pred_region
      %s13 = ssub.s32 256, 256
      %14 = vsyncadd [#allocation3], %s13
      %s16 = sshll.u32 [#allocation2], 4
      %s17 = int_to_ptr.vmem [resolvable:$true] %s16
      %19 = dma.hbm_to_vmem [thread:$0]  %s0, 256, %s17, [#allocation3]
    $region5: #{tpu_custom_call.1} parent=1 // pred_fallthru
      _
    // Predicated region
    $region6: #{tpu_custom_call.1} parent=1 // pred_check
      _
    $region7: #{tpu_custom_call.1} parent=1 // pred_check_branch
      %21 = sbr.rel (0) target = $region9
    $region8: #{tpu_custom_call.1} parent=1 // pred_region
      %s23 = ssub.s32 256, 256
      %24 = vsyncadd [#allocation6], %s23
      %s26 = sshll.u32 [#allocation5], 4
      %s27 = int_to_ptr.vmem [resolvable:$true] %s26
      %29 = dma.hbm_to_vmem [thread:$0]  %s1, 256, %s27, [#allocation6]
    $region9: #{tpu_custom_call.1} parent=1 // pred_fallthru
      _
    // Predicated region
    $region10: #{tpu_custom_call.1} parent=1 // pred_check
      _
    $region11: #{tpu_custom_call.1} parent=1 // pred_check_branch
      %31 = sbr.rel (0) target = $region13
    $region12: #{tpu_custom_call.1} parent=1 // pred_region
      %32 = dma.done [#allocation3], 256
    $region13: #{tpu_custom_call.1} parent=1 // pred_fallthru
      _
    // Predicated region
    $region14: #{tpu_custom_call.1} parent=1 // pred_check
      _
    $region15: #{tpu_custom_call.1} parent=1 // pred_check_branch
      %34 = sbr.rel (0) target = $region17
    $region16: #{tpu_custom_call.1} parent=1 // pred_region
      %35 = dma.done [#allocation6], 256
    $region17: #{tpu_custom_call.1} parent=1 // pred_fallthru
      _
    %v36 = vld [vmem:[#allocation2] sm:$0xff]
    %v37 = vld [vmem:[#allocation2 + $0x8] sm:$0xff]
    %v38 = vld [vmem:[#allocation5] ss:$2 sm:$0xff]
    %s39 = scalar_lea.vmem [#allocation5], 1
    %v40 = vld [vmem:[%s39] ss:$2 sm:$0xff]
    %v42 = vlaneseq
    %v43 = vshrl.u32 %v42, 7
    %v44 = vsub.s32 0, %v43
    %v45 = vrot.slane %v38, %v44
    %v46 = vlaneseq
    %v47 = vshrl.u32 %v46, 7
    %v48 = vsub.s32 1, %v47
    %v49 = vrot.slane %v38, %v48
    %v50 = vlaneseq
    %v51 = vshrl.u32 %v50, 7
    %v52 = vsub.s32 2, %v51
    %v53 = vrot.slane %v38, %v52
    %v54 = vlaneseq
    %v55 = vshrl.u32 %v54, 7
    %v56 = vsub.s32 3, %v55
    %v57 = vrot.slane %v38, %v56
    %v58 = vlaneseq
    %v59 = vshrl.u32 %v58, 7
    %v60 = vsub.s32 4, %v59
    %v61 = vrot.slane %v38, %v60
    %v62 = vlaneseq
    %v63 = vshrl.u32 %v62, 7
    %v64 = vsub.s32 5, %v63
    %v65 = vrot.slane %v38, %v64
    %v66 = vlaneseq
    %v67 = vshrl.u32 %v66, 7
    %v68 = vsub.s32 6, %v67
    %v69 = vrot.slane %v38, %v68
    %v70 = vlaneseq
    %v71 = vshrl.u32 %v70, 7
    %v72 = vsub.s32 7, %v71
    %v73 = vrot.slane %v38, %v72
    %v74 = vcombine.low %v45, %v49
    %v75 = vcombine.low %v53, %v57
    %v77 = vunpack.c.l.s4 1983009808
    %v78 = vunpack.c.0.s8 %v77
    %v79 = vlaneseq
    %v80 = vshrl.u32 %v79, 7
    %v81 = vsub.s32 %v78, %v80
    %v82 = vrot.slane %v74, %v81
    %v84 = vunpack.c.l.s4 1983009808
    %v85 = vunpack.c.0.s8 %v84
    %v86 = vlaneseq
    %v87 = vshrl.u32 %v86, 7
    %v88 = vsub.s32 %v85, %v87
    %v89 = vrot.slane %v75, %v88
    %v90 = vcombine.low %v82, %v89
    %v91 = vcombine.low %v61, %v65
    %v92 = vcombine.low %v69, %v73
    %v94 = vunpack.c.l.s4 1983009808
    %v95 = vunpack.c.0.s8 %v94
    %v96 = vlaneseq
    %v97 = vshrl.u32 %v96, 7
    %v98 = vsub.s32 %v95, %v97
    %v99 = vrot.slane %v91, %v98
    %v101 = vunpack.c.l.s4 1983009808
    %v102 = vunpack.c.0.s8 %v101
    %v103 = vlaneseq
    %v104 = vshrl.u32 %v103, 7
    %v105 = vsub.s32 %v102, %v104
    %v106 = vrot.slane %v92, %v105
    %v107 = vcombine.low %v99, %v106
    %v110 = vmul.f32 %v36, %v90
    %v111 = vmul.f32 %v37, %v107
    %v113 = vlaneseq
    %v114 = vshrl.u32 %v113, 7
    %v115 = vsub.s32 0, %v114
    %v116 = vrot.slane %v40, %v115
    %v117 = vlaneseq
    %v118 = vshrl.u32 %v117, 7
    %v119 = vsub.s32 1, %v118
    %v120 = vrot.slane %v40, %v119
    %v121 = vlaneseq
    %v122 = vshrl.u32 %v121, 7
    %v123 = vsub.s32 2, %v122
    %v124 = vrot.slane %v40, %v123
    %v125 = vlaneseq
    %v126 = vshrl.u32 %v125, 7
    %v127 = vsub.s32 3, %v126
    %v128 = vrot.slane %v40, %v127
    %v129 = vlaneseq
    %v130 = vshrl.u32 %v129, 7
    %v131 = vsub.s32 4, %v130
    %v132 = vrot.slane %v40, %v131
    %v133 = vlaneseq
    %v134 = vshrl.u32 %v133, 7
    %v135 = vsub.s32 5, %v134
    %v136 = vrot.slane %v40, %v135
    %v137 = vlaneseq
    %v138 = vshrl.u32 %v137, 7
    %v139 = vsub.s32 6, %v138
    %v140 = vrot.slane %v40, %v139
    %v141 = vlaneseq
    %v142 = vshrl.u32 %v141, 7
    %v143 = vsub.s32 7, %v142
    %v144 = vrot.slane %v40, %v143
    %v145 = vcombine.low %v116, %v120
    %v146 = vcombine.low %v124, %v128
    %v148 = vunpack.c.l.s4 1983009808
    %v149 = vunpack.c.0.s8 %v148
    %v150 = vlaneseq
    %v151 = vshrl.u32 %v150, 7
    %v152 = vsub.s32 %v149, %v151
    %v153 = vrot.slane %v145, %v152
    %v155 = vunpack.c.l.s4 1983009808
    %v156 = vunpack.c.0.s8 %v155
    %v157 = vlaneseq
    %v158 = vshrl.u32 %v157, 7
    %v159 = vsub.s32 %v156, %v158
    %v160 = vrot.slane %v146, %v159
    %v161 = vcombine.low %v153, %v160
    %v162 = vcombine.low %v132, %v136
    %v163 = vcombine.low %v140, %v144
    %v165 = vunpack.c.l.s4 1983009808
    %v166 = vunpack.c.0.s8 %v165
    %v167 = vlaneseq
    %v168 = vshrl.u32 %v167, 7
    %v169 = vsub.s32 %v166, %v168
    %v170 = vrot.slane %v162, %v169
    %v172 = vunpack.c.l.s4 1983009808
    %v173 = vunpack.c.0.s8 %v172
    %v174 = vlaneseq
    %v175 = vshrl.u32 %v174, 7
    %v176 = vsub.s32 %v173, %v175
    %v177 = vrot.slane %v163, %v176
    %v178 = vcombine.low %v170, %v177
    %v181 = vadd.f32 %v110, %v161
    %v182 = vadd.f32 %v111, %v178
    %183 = vst [vmem:[#allocation7] sm:$0xff] %v181
    %184 = vst [vmem:[#allocation7 + $0x8] sm:$0xff] %v182
    // Predicated region
    $region18: #{tpu_custom_call.1} parent=1 // pred_check
      _
    $region19: #{tpu_custom_call.1} parent=1 // pred_check_branch
      %186 = sbr.rel (0) target = $region21
    $region20: #{tpu_custom_call.1} parent=1 // pred_region
      %s188 = ssub.s32 256, 256
      %189 = vsyncadd [#allocation4], %s188
      %s191 = sshll.u32 [#allocation7], 4
      %s192 = int_to_ptr.vmem [resolvable:$true] %s191
      %194 = dma.vmem_to_hbm [thread:$0]  %s192, 256, %s2, [#allocation4]
    $region21: #{tpu_custom_call.1} parent=1 // pred_fallthru
      _
    // Predicated region
    $region22: #{tpu_custom_call.1} parent=1 // pred_check
      _
    $region23: #{tpu_custom_call.1} parent=1 // pred_check_branch
      %196 = sbr.rel (0) target = $region25
    $region24: #{tpu_custom_call.1} parent=1 // pred_region
      %197 = dma.done [#allocation4], 256
    $region25: #{tpu_custom_call.1} parent=1 // pred_fallthru
      _
    %198 = vsyncpa [#allocation3], 1
    %199 = vsyncpa [#allocation6], 1
    %200 = vsyncpa [#allocation4], 1

</llo_original>
